<compile_context>
chip_gen: v6e
topology: v6e:2x2x1
jax: 0.10.0
libtpu: 0.0.40
codegen_flags: <defaults>
</compile_context>

<pallas_src>
import jax
import jax.numpy as jnp
from jax.experimental import pallas as pl
from jax.experimental.pallas import tpu as pltpu

INPUT_SIZE = 1118
H1 = 10
H2 = 12
H3 = 16
OUT = 2

DEFAULT_BLOCK_B = 2048          # rows per batch tile (multiple of 8)
VMEM_LIMIT_BYTES = 40 << 20     # covers 2048-row f32 x tile, double-buffered


def mlp_kernel(x_ref, w1_ref, b1_ref, w2_ref, b2_ref, w3_ref, b3_ref,
               w4_ref, b4_ref, o_ref):
    # fc1 + relu: x streamed as stored (f32), cast to bf16 only for the MXU;
    # f32 accumulation, bias-add / ReLU in f32.
    x_bf = x_ref[...].astype(jnp.bfloat16)
    h = jnp.dot(x_bf, w1_ref[...], preferred_element_type=jnp.float32)
    h = jnp.maximum(h + b1_ref[...], 0.0)
    # fc2 + relu (tiny; keep f32 — noise either way)
    h = jnp.dot(h, w2_ref[...], preferred_element_type=jnp.float32)
    h = jnp.maximum(h + b2_ref[...], 0.0)
    # fc3 + relu
    h = jnp.dot(h, w3_ref[...], preferred_element_type=jnp.float32)
    h = jnp.maximum(h + b3_ref[...], 0.0)
    # fc4 (no activation)
    h = jnp.dot(h, w4_ref[...], preferred_element_type=jnp.float32)
    o_ref[...] = (h + b4_ref[...]).astype(o_ref.dtype)


def _ceil8(n):
    return ((n + 7) // 8) * 8


def audio_classifier_forward(x, params, *, block_b=DEFAULT_BLOCK_B):
    """x: (B, ...) flattened to (B, INPUT_SIZE). Returns (B, 2) f32 logits."""
    B = x.shape[0]
    x2d = jnp.reshape(x, (B, -1)).astype(jnp.float32)   # nn.Flatten
    assert x2d.shape[1] == INPUT_SIZE

    # --- tile selection: bound padding waste (tb ~= ceil8(B / n_tiles)) and
    #     prefer >= 2 tiles so both v7x TensorCores get work. ---------------
    n_tiles = pl.cdiv(B, block_b)
    if B >= 16:
        n_tiles = max(n_tiles, 2)
    tb = _ceil8(pl.cdiv(B, n_tiles))
    Bp = n_tiles * tb
    x_pad = x2d if Bp == B else jnp.pad(x2d, ((0, Bp - B), (0, 0)))

    w1, b1, w2, b2, w3, b3, w4, b4 = params
    # fc1 weight in bf16 (matches the in-kernel bf16 cast of x); it is tiny
    # and DMA'd once.  fc2-fc4 weights stay f32.  Biases stay f32.
    w1b = w1.astype(jnp.bfloat16)
    w2f, w3f, w4f = (w.astype(jnp.float32) for w in (w2, w3, w4))
    b1f, b2f, b3f, b4f = (b.astype(jnp.float32) for b in (b1, b2, b3, b4))

    # constant index_map -> params DMA'd once, VMEM-resident across tiles
    def resident(shape):
        return pl.BlockSpec(shape, lambda i: (0, 0))

    in_specs = [
        # x: streamed per batch tile in its stored f32 form; last block dim
        # equals the full feature dim (no 128-pad required).
        pl.BlockSpec((tb, INPUT_SIZE), lambda i: (i, 0)),
        resident((INPUT_SIZE, H1)), resident((1, H1)),
        resident((H1, H2)),         resident((1, H2)),
        resident((H2, H3)),         resident((1, H3)),
        resident((H3, OUT)),        resident((1, OUT)),
    ]
    out_spec = pl.BlockSpec((tb, OUT), lambda i: (i, 0))

    flops = 2 * Bp * (INPUT_SIZE * H1 + H1 * H2 + H2 * H3 + H3 * OUT)
    weight_bytes = (2 * INPUT_SIZE * H1
                    + 4 * (H1 * H2 + H2 * H3 + H3 * OUT)
                    + 4 * (H1 + H2 + H3 + OUT))
    bytes_accessed = Bp * INPUT_SIZE * 4 + weight_bytes + Bp * OUT * 4

    out_padded = pl.pallas_call(
        mlp_kernel,
        out_shape=jax.ShapeDtypeStruct((Bp, OUT), jnp.float32),
        grid=(n_tiles,),
        in_specs=in_specs,
        out_specs=out_spec,
        compiler_params=pltpu.CompilerParams(
            dimension_semantics=("parallel",),
            vmem_limit_bytes=VMEM_LIMIT_BYTES),
        cost_estimate=pl.CostEstimate(
            flops=flops, transcendentals=0, bytes_accessed=bytes_accessed),
    )(x_pad, w1b, b1f, w2f, b2f, w3f, b3f, w4f, b4f)

    return out_padded[:B]


def init_params(key):
    """Deterministic init mimicking nn.Linear's U(-1/sqrt(fan_in), 1/sqrt(fan_in)).

    Weights stored as (in_features, out_features) (transpose of PyTorch layout),
    biases as (1, out_features).
    """
    dims = [(INPUT_SIZE, H1), (H1, H2), (H2, H3), (H3, OUT)]
    params = []
    for (fan_in, fan_out) in dims:
        key, kw, kb = jax.random.split(key, 3)
        bound = 1.0 / (fan_in ** 0.5)
        w = jax.random.uniform(kw, (fan_in, fan_out), jnp.float32, -bound, bound)
        b = jax.random.uniform(kb, (1, fan_out), jnp.float32, -bound, bound)
        params += [w, b]
    return tuple(params)


def reference_forward(x, params):
    B = x.shape[0]
    h = jnp.reshape(x, (B, -1)).astype(jnp.float32)
    w1, b1, w2, b2, w3, b3, w4, b4 = params
    h = jnp.maximum(h @ w1 + b1, 0.0)
    h = jnp.maximum(h @ w2 + b2, 0.0)
    h = jnp.maximum(h @ w3 + b3, 0.0)
    return h @ w4 + b4


if __name__ == "__main__":
    key = jax.random.PRNGKey(0)
    key, kx = jax.random.split(key)

    batch = 2
    x = jax.random.normal(kx, (batch, INPUT_SIZE), jnp.float32)

    params = init_params(key)

    out = audio_classifier_forward(x, params)
    out = jax.block_until_ready(out)

    ref = reference_forward(x, params)
    assert out.shape == (batch, OUT), out.shape
    # fc1 runs in bf16 on the MXU with f32 accumulation: loosened tolerance.
    assert jnp.allclose(out, ref, atol=3e-2, rtol=3e-2), "mismatch vs reference"

    print("KERNEL_OK")
</pallas_src>

<mosaic_0001>
module attributes {stable_mosaic.version = 11 : i64} {
  func.func @mlp_kernel(%arg0: i32, %arg1: memref<8x1118xf32, #tpu.memory_space<vmem>>, %arg2: memref<1118x10xbf16, #tpu.memory_space<vmem>>, %arg3: memref<1x10xf32, #tpu.memory_space<vmem>>, %arg4: memref<10x12xf32, #tpu.memory_space<vmem>>, %arg5: memref<1x12xf32, #tpu.memory_space<vmem>>, %arg6: memref<12x16xf32, #tpu.memory_space<vmem>>, %arg7: memref<1x16xf32, #tpu.memory_space<vmem>>, %arg8: memref<16x2xf32, #tpu.memory_space<vmem>>, %arg9: memref<1x2xf32, #tpu.memory_space<vmem>>, %arg10: memref<8x2xf32, #tpu.memory_space<vmem>>) attributes {dimension_semantics = [#tpu.dimension_semantics<parallel>], iteration_bounds = array<i64: 1>, scalar_prefetch = 0 : i64, scratch_operands = 0 : i64, tpu.core_type = #tpu.core_type<tc>, window_params = [{transform_indices = @transform_0, window_bounds = array<i64: 8, 1118>}, {pipeline_mode = #tpu.pipeline_mode<synchronous>, transform_indices = @transform_1, window_bounds = array<i64: 1118, 10>}, {pipeline_mode = #tpu.pipeline_mode<synchronous>, transform_indices = @transform_2, window_bounds = array<i64: 1, 10>}, {pipeline_mode = #tpu.pipeline_mode<synchronous>, transform_indices = @transform_3, window_bounds = array<i64: 10, 12>}, {pipeline_mode = #tpu.pipeline_mode<synchronous>, transform_indices = @transform_4, window_bounds = array<i64: 1, 12>}, {pipeline_mode = #tpu.pipeline_mode<synchronous>, transform_indices = @transform_5, window_bounds = array<i64: 12, 16>}, {pipeline_mode = #tpu.pipeline_mode<synchronous>, transform_indices = @transform_6, window_bounds = array<i64: 1, 16>}, {pipeline_mode = #tpu.pipeline_mode<synchronous>, transform_indices = @transform_7, window_bounds = array<i64: 16, 2>}, {pipeline_mode = #tpu.pipeline_mode<synchronous>, transform_indices = @transform_8, window_bounds = array<i64: 1, 2>}, {transform_indices = @transform_9, window_bounds = array<i64: 8, 2>}]} {
    %c0 = arith.constant 0 : index
    %c0_0 = arith.constant 0 : index
    %0 = vector.load %arg1[%c0, %c0_0] : memref<8x1118xf32, #tpu.memory_space<vmem>>, vector<8x1118xf32>
    %1 = arith.truncf %0 : vector<8x1118xf32> to vector<8x1118xbf16>
    %c0_1 = arith.constant 0 : index
    %c0_2 = arith.constant 0 : index
    %2 = vector.load %arg2[%c0_1, %c0_2] : memref<1118x10xbf16, #tpu.memory_space<vmem>>, vector<1118x10xbf16>
    %cst = arith.constant dense<0.000000e+00> : vector<8x10xf32>
    %3 = tpu.matmul %1, %2, %cst {dimension_numbers = #tpu.dot_dimension_numbers<[1], [0], [0], [1], [0, 0, 1, 1], [], []>} : vector<8x1118xbf16>, vector<1118x10xbf16>, vector<8x10xf32> -> vector<8x10xf32>
    %c0_3 = arith.constant 0 : index
    %c0_4 = arith.constant 0 : index
    %4 = vector.load %arg3[%c0_3, %c0_4] : memref<1x10xf32, #tpu.memory_space<vmem>>, vector<1x10xf32>
    %5 = vector.broadcast %4 : vector<1x10xf32> to vector<8x10xf32>
    %6 = arith.addf %3, %5 : vector<8x10xf32>
    %cst_5 = arith.constant 0.000000e+00 : f32
    %7 = vector.broadcast %cst_5 : f32 to vector<8x10xf32>
    %8 = arith.maximumf %6, %7 : vector<8x10xf32>
    %c0_6 = arith.constant 0 : index
    %c0_7 = arith.constant 0 : index
    %9 = vector.load %arg4[%c0_6, %c0_7] : memref<10x12xf32, #tpu.memory_space<vmem>>, vector<10x12xf32>
    %cst_8 = arith.constant dense<0.000000e+00> : vector<8x12xf32>
    %10 = tpu.matmul %8, %9, %cst_8 {dimension_numbers = #tpu.dot_dimension_numbers<[1], [0], [0], [1], [0, 0, 1, 1], [], []>} : vector<8x10xf32>, vector<10x12xf32>, vector<8x12xf32> -> vector<8x12xf32>
    %c0_9 = arith.constant 0 : index
    %c0_10 = arith.constant 0 : index
    %11 = vector.load %arg5[%c0_9, %c0_10] : memref<1x12xf32, #tpu.memory_space<vmem>>, vector<1x12xf32>
    %12 = vector.broadcast %11 : vector<1x12xf32> to vector<8x12xf32>
    %13 = arith.addf %10, %12 : vector<8x12xf32>
    %cst_11 = arith.constant 0.000000e+00 : f32
    %14 = vector.broadcast %cst_11 : f32 to vector<8x12xf32>
    %15 = arith.maximumf %13, %14 : vector<8x12xf32>
    %c0_12 = arith.constant 0 : index
    %c0_13 = arith.constant 0 : index
    %16 = vector.load %arg6[%c0_12, %c0_13] : memref<12x16xf32, #tpu.memory_space<vmem>>, vector<12x16xf32>
    %cst_14 = arith.constant dense<0.000000e+00> : vector<8x16xf32>
    %17 = tpu.matmul %15, %16, %cst_14 {dimension_numbers = #tpu.dot_dimension_numbers<[1], [0], [0], [1], [0, 0, 1, 1], [], []>} : vector<8x12xf32>, vector<12x16xf32>, vector<8x16xf32> -> vector<8x16xf32>
    %c0_15 = arith.constant 0 : index
    %c0_16 = arith.constant 0 : index
    %18 = vector.load %arg7[%c0_15, %c0_16] : memref<1x16xf32, #tpu.memory_space<vmem>>, vector<1x16xf32>
    %19 = vector.broadcast %18 : vector<1x16xf32> to vector<8x16xf32>
    %20 = arith.addf %17, %19 : vector<8x16xf32>
    %cst_17 = arith.constant 0.000000e+00 : f32
    %21 = vector.broadcast %cst_17 : f32 to vector<8x16xf32>
    %22 = arith.maximumf %20, %21 : vector<8x16xf32>
    %c0_18 = arith.constant 0 : index
    %c0_19 = arith.constant 0 : index
    %23 = vector.load %arg8[%c0_18, %c0_19] : memref<16x2xf32, #tpu.memory_space<vmem>>, vector<16x2xf32>
    %cst_20 = arith.constant dense<0.000000e+00> : vector<8x2xf32>
    %24 = tpu.matmul %22, %23, %cst_20 {dimension_numbers = #tpu.dot_dimension_numbers<[1], [0], [0], [1], [0, 0, 1, 1], [], []>} : vector<8x16xf32>, vector<16x2xf32>, vector<8x2xf32> -> vector<8x2xf32>
    %c0_21 = arith.constant 0 : index
    %c0_22 = arith.constant 0 : index
    %25 = vector.load %arg9[%c0_21, %c0_22] : memref<1x2xf32, #tpu.memory_space<vmem>>, vector<1x2xf32>
    %26 = vector.broadcast %25 : vector<1x2xf32> to vector<8x2xf32>
    %27 = arith.addf %24, %26 : vector<8x2xf32>
    %c0_23 = arith.constant 0 : index
    %c0_24 = arith.constant 0 : index
    %28 = vector.load %arg10[%c0_23, %c0_24] : memref<8x2xf32, #tpu.memory_space<vmem>>, vector<8x2xf32>
    tpu.vector_store %arg10[%c0_23, %c0_24], %27 {strides = array<i32>} : memref<8x2xf32, #tpu.memory_space<vmem>>, vector<8x2xf32>,
    return
  }
  func.func @transform_0(%arg0: i32) -> (i32, i32) {
    %c0_i32 = arith.constant 0 : i32
    %c0_i32_0 = arith.constant 0 : i32
    return %arg0, %c0_i32 : i32, i32
  }
  func.func @transform_1(%arg0: i32) -> (i32, i32) {
    %c0_i32 = arith.constant 0 : i32
    %c0_i32_0 = arith.constant 0 : i32
    %c0_i32_1 = arith.constant 0 : i32
    return %c0_i32, %c0_i32_0 : i32, i32
  }
  func.func @transform_2(%arg0: i32) -> (i32, i32) {
    %c0_i32 = arith.constant 0 : i32
    %c0_i32_0 = arith.constant 0 : i32
    %c0_i32_1 = arith.constant 0 : i32
    return %c0_i32, %c0_i32_0 : i32, i32
  }
  func.func @transform_3(%arg0: i32) -> (i32, i32) {
    %c0_i32 = arith.constant 0 : i32
    %c0_i32_0 = arith.constant 0 : i32
    %c0_i32_1 = arith.constant 0 : i32
    return %c0_i32, %c0_i32_0 : i32, i32
  }
  func.func @transform_4(%arg0: i32) -> (i32, i32) {
    %c0_i32 = arith.constant 0 : i32
    %c0_i32_0 = arith.constant 0 : i32
    %c0_i32_1 = arith.constant 0 : i32
    return %c0_i32, %c0_i32_0 : i32, i32
  }
  func.func @transform_5(%arg0: i32) -> (i32, i32) {
    %c0_i32 = arith.constant 0 : i32
    %c0_i32_0 = arith.constant 0 : i32
    %c0_i32_1 = arith.constant 0 : i32
    return %c0_i32, %c0_i32_0 : i32, i32
  }
  func.func @transform_6(%arg0: i32) -> (i32, i32) {
    %c0_i32 = arith.constant 0 : i32
    %c0_i32_0 = arith.constant 0 : i32
    %c0_i32_1 = arith.constant 0 : i32
    return %c0_i32, %c0_i32_0 : i32, i32
  }
  func.func @transform_7(%arg0: i32) -> (i32, i32) {
    %c0_i32 = arith.constant 0 : i32
    %c0_i32_0 = arith.constant 0 : i32
    %c0_i32_1 = arith.constant 0 : i32
    return %c0_i32, %c0_i32_0 : i32, i32
  }
  func.func @transform_8(%arg0: i32) -> (i32, i32) {
    %c0_i32 = arith.constant 0 : i32
    %c0_i32_0 = arith.constant 0 : i32
    %c0_i32_1 = arith.constant 0 : i32
    return %c0_i32, %c0_i32_0 : i32, i32
  }
  func.func @transform_9(%arg0: i32) -> (i32, i32) {
    %c0_i32 = arith.constant 0 : i32
    %c0_i32_0 = arith.constant 0 : i32
    return %arg0, %c0_i32 : i32, i32
  }
}

</mosaic_0001>

<llo_original>
// kernel: tpu_custom_call.1
$region0: #{tpu_custom_call.1}
  #allocation0 [shape = 'u32[]', space=smem, size = 0x4, offset = 0x4, fixed_abs, tag = 'smem constant byte address 0x4 - core index']
  #allocation1 [shape = 'u32[144,128]{1,0:T(1,128)}', space=vmem, size = 0x12000, scoped, tag = 'internal scratch']
  %s0 = inlined_call_operand.vmem [shape: f32[8,1118], index: 0, kind: input, shape index: {}]
  %s1 = inlined_call_operand.vmem [shape: bf16[1118,10], index: 1, kind: input, shape index: {}]
  %s2 = inlined_call_operand.vmem [shape: f32[1,10], index: 2, kind: input, shape index: {}]
  %s3 = inlined_call_operand.vmem [shape: f32[10,12], index: 3, kind: input, shape index: {}]
  %s4 = inlined_call_operand.vmem [shape: f32[1,12], index: 4, kind: input, shape index: {}]
  %s5 = inlined_call_operand.vmem [shape: f32[12,16], index: 5, kind: input, shape index: {}]
  %s6 = inlined_call_operand.vmem [shape: f32[1,16], index: 6, kind: input, shape index: {}]
  %s7 = inlined_call_operand.vmem [shape: f32[16,2], index: 7, kind: input, shape index: {}]
  %s8 = inlined_call_operand.vmem [shape: f32[1,2], index: 8, kind: input, shape index: {}]
  %s9 = inlined_call_operand.vmem [shape: f32[8,2], index: 9, kind: output, shape index: {}]
  %s10 = sld [smem:[#allocation0]]
  $region46: #{tpu_custom_call.1} parent=0
    _
  %s12 = ssub.s32 1, %s10
  %s13 = scalar_select 0, %s12, %s10
  // Predicated region
  $region2: #{tpu_custom_call.1} parent=0 // pred_check
    _
  $region3: #{tpu_custom_call.1} parent=0 // pred_check_branch
    %15 = sbr.rel (0) target = $region5
  $region4: #{tpu_custom_call.1} parent=0 // pred_region
    _
  $region5: #{tpu_custom_call.1} parent=0 // pred_fallthru
    _
  // Predicated region
  $region6: #{tpu_custom_call.1} parent=0 // pred_check
    _
  $region7: #{tpu_custom_call.1} parent=0 // pred_check_branch
    %17 = sbr.rel (0) target = $region9
  $region8: #{tpu_custom_call.1} parent=0 // pred_region
    _
  $region9: #{tpu_custom_call.1} parent=0 // pred_fallthru
    _
  // Predicated region
  $region10: #{tpu_custom_call.1} parent=0 // pred_check
    _
  $region11: #{tpu_custom_call.1} parent=0 // pred_check_branch
    %19 = sbr.rel (0) target = $region13
  $region12: #{tpu_custom_call.1} parent=0 // pred_region
    _
  $region13: #{tpu_custom_call.1} parent=0 // pred_fallthru
    _
  // Predicated region
  $region14: #{tpu_custom_call.1} parent=0 // pred_check
    _
  $region15: #{tpu_custom_call.1} parent=0 // pred_check_branch
    %21 = sbr.rel (0) target = $region17
  $region16: #{tpu_custom_call.1} parent=0 // pred_region
    _
  $region17: #{tpu_custom_call.1} parent=0 // pred_fallthru
    _
  // Predicated region
  $region18: #{tpu_custom_call.1} parent=0 // pred_check
    _
  $region19: #{tpu_custom_call.1} parent=0 // pred_check_branch
    %23 = sbr.rel (0) target = $region21
  $region20: #{tpu_custom_call.1} parent=0 // pred_region
    _
  $region21: #{tpu_custom_call.1} parent=0 // pred_fallthru
    _
  // Predicated region
  $region22: #{tpu_custom_call.1} parent=0 // pred_check
    _
  $region23: #{tpu_custom_call.1} parent=0 // pred_check_branch
    %25 = sbr.rel (0) target = $region25
  $region24: #{tpu_custom_call.1} parent=0 // pred_region
    _
  $region25: #{tpu_custom_call.1} parent=0 // pred_fallthru
    _
  // Predicated region
  $region26: #{tpu_custom_call.1} parent=0 // pred_check
    _
  $region27: #{tpu_custom_call.1} parent=0 // pred_check_branch
    %27 = sbr.rel (0) target = $region29
  $region28: #{tpu_custom_call.1} parent=0 // pred_region
    _
  $region29: #{tpu_custom_call.1} parent=0 // pred_fallthru
    _
  // Predicated region
  $region30: #{tpu_custom_call.1} parent=0 // pred_check
    _
  $region31: #{tpu_custom_call.1} parent=0 // pred_check_branch
    %29 = sbr.rel (0) target = $region33
  $region32: #{tpu_custom_call.1} parent=0 // pred_region
    _
  $region33: #{tpu_custom_call.1} parent=0 // pred_fallthru
    _
  // Predicated region
  $region34: #{tpu_custom_call.1} parent=0 // pred_check
    _
  $region35: #{tpu_custom_call.1} parent=0 // pred_check_branch
    %31 = sbr.rel (0) target = $region37
  $region36: #{tpu_custom_call.1} parent=0 // pred_region
    _
  $region37: #{tpu_custom_call.1} parent=0 // pred_fallthru
    _
  %v33 = vld [vmem:[%s0] sm:$0xff]
  %v34 = vld [vmem:[%s0 + $0x8] sm:$0xff]
  %v35 = vld [vmem:[%s0 + $0x10] sm:$0xff]
  %v36 = vld [vmem:[%s0 + $0x18] sm:$0xff]
  %v37 = vld [vmem:[%s0 + $0x20] sm:$0xff]
  %v38 = vld [vmem:[%s0 + $0x28] sm:$0xff]
  %v39 = vld [vmem:[%s0 + $0x30] sm:$0xff]
  %v40 = vld [vmem:[%s0 + $0x38] sm:$0xff]
  %v41 = vld [vmem:[%s0 + $0x40] sm:$0xff]
  %v42 = vpack.c.bf16 %v33, %v33
  %v43 = vpack.c.bf16 %v34, %v34
  %v44 = vpack.c.bf16 %v35, %v35
  %v45 = vpack.c.bf16 %v36, %v36
  %v46 = vpack.c.bf16 %v37, %v37
  %v47 = vpack.c.bf16 %v38, %v38
  %v48 = vpack.c.bf16 %v39, %v39
  %v49 = vpack.c.bf16 %v40, %v40
  %v50 = vpack.c.bf16 %v41, %v41
  %v51 = vld [vmem:[%s1] sm:$0xf]
  %v52 = vld [vmem:[%s1 + $0x4] sm:$0xf]
  %v53 = vld [vmem:[%s1 + $0x8] sm:$0xf]
  %v54 = vld [vmem:[%s1 + $0xc] sm:$0xf]
  %v55 = vld [vmem:[%s1 + $0x10] sm:$0xf]
  %v56 = vld [vmem:[%s1 + $0x14] sm:$0xf]
  %v57 = vld [vmem:[%s1 + $0x18] sm:$0xf]
  %v58 = vld [vmem:[%s1 + $0x1c] sm:$0xf]
  %v59 = vld [vmem:[%s1 + $0x20] sm:$0xf]
  %v60 = vld [vmem:[%s1 + $0x24] sm:$0xf]
  %v61 = vld [vmem:[%s1 + $0x28] sm:$0xf]
  %v62 = vld [vmem:[%s1 + $0x2c] sm:$0xf]
  %v63 = vld [vmem:[%s1 + $0x30] sm:$0xf]
  %v64 = vld [vmem:[%s1 + $0x34] sm:$0xf]
  %v65 = vld [vmem:[%s1 + $0x38] sm:$0xf]
  %v66 = vld [vmem:[%s1 + $0x3c] sm:$0xf]
  %v67 = vld [vmem:[%s1 + $0x40] sm:$0xf]
  %v68 = vld [vmem:[%s1 + $0x44] sm:$0xf]
  %v69 = vld [vmem:[%s1 + $0x48] sm:$0xf]
  %v70 = vld [vmem:[%s1 + $0x4c] sm:$0xf]
  %v71 = vld [vmem:[%s1 + $0x50] sm:$0xf]
  %v72 = vld [vmem:[%s1 + $0x54] sm:$0xf]
  %v73 = vld [vmem:[%s1 + $0x58] sm:$0xf]
  %v74 = vld [vmem:[%s1 + $0x5c] sm:$0xf]
  %v75 = vld [vmem:[%s1 + $0x60] sm:$0xf]
  %v76 = vld [vmem:[%s1 + $0x64] sm:$0xf]
  %v77 = vld [vmem:[%s1 + $0x68] sm:$0xf]
  %v78 = vld [vmem:[%s1 + $0x6c] sm:$0xf]
  %v79 = vld [vmem:[%s1 + $0x70] sm:$0xf]
  %v80 = vld [vmem:[%s1 + $0x74] sm:$0xf]
  %v81 = vld [vmem:[%s1 + $0x78] sm:$0xf]
  %v82 = vld [vmem:[%s1 + $0x7c] sm:$0xf]
  %v83 = vld [vmem:[%s1 + $0x80] sm:$0xf]
  %v84 = vld [vmem:[%s1 + $0x84] sm:$0xf]
  %v85 = vld [vmem:[%s1 + $0x88] sm:$0xf]
  %v86 = vld [vmem:[%s1 + $0x8c] sm:$0xf]
  %v87 = vld [vmem:[%s1 + $0x90] sm:$0xf]
  %v88 = vld [vmem:[%s1 + $0x94] sm:$0xf]
  %v89 = vld [vmem:[%s1 + $0x98] sm:$0xf]
  %v90 = vld [vmem:[%s1 + $0x9c] sm:$0xf]
  %v91 = vld [vmem:[%s1 + $0xa0] sm:$0xf]
  %v92 = vld [vmem:[%s1 + $0xa4] sm:$0xf]
  %v93 = vld [vmem:[%s1 + $0xa8] sm:$0xf]
  %v94 = vld [vmem:[%s1 + $0xac] sm:$0xf]
  %v95 = vld [vmem:[%s1 + $0xb0] sm:$0xf]
  %v96 = vld [vmem:[%s1 + $0xb4] sm:$0xf]
  %v97 = vld [vmem:[%s1 + $0xb8] sm:$0xf]
  %v98 = vld [vmem:[%s1 + $0xbc] sm:$0xf]
  %v99 = vld [vmem:[%s1 + $0xc0] sm:$0xf]
  %v100 = vld [vmem:[%s1 + $0xc4] sm:$0xf]
  %v101 = vld [vmem:[%s1 + $0xc8] sm:$0xf]
  %v102 = vld [vmem:[%s1 + $0xcc] sm:$0xf]
  %v103 = vld [vmem:[%s1 + $0xd0] sm:$0xf]
  %v104 = vld [vmem:[%s1 + $0xd4] sm:$0xf]
  %v105 = vld [vmem:[%s1 + $0xd8] sm:$0xf]
  %v106 = vld [vmem:[%s1 + $0xdc] sm:$0xf]
  %v107 = vld [vmem:[%s1 + $0xe0] sm:$0xf]
  %v108 = vld [vmem:[%s1 + $0xe4] sm:$0xf]
  %v109 = vld [vmem:[%s1 + $0xe8] sm:$0xf]
  %v110 = vld [vmem:[%s1 + $0xec] sm:$0xf]
  %v111 = vld [vmem:[%s1 + $0xf0] sm:$0xf]
  %v112 = vld [vmem:[%s1 + $0xf4] sm:$0xf]
  %v113 = vld [vmem:[%s1 + $0xf8] sm:$0xf]
  %v114 = vld [vmem:[%s1 + $0xfc] sm:$0xf]
  %v115 = vld [vmem:[%s1 + $0x100] sm:$0xf]
  %v116 = vld [vmem:[%s1 + $0x104] sm:$0xf]
  %v117 = vld [vmem:[%s1 + $0x108] sm:$0xf]
  %v118 = vld [vmem:[%s1 + $0x10c] sm:$0xf]
  %v119 = vld [vmem:[%s1 + $0x110] sm:$0xf]
  %v120 = vld [vmem:[%s1 + $0x114] sm:$0xf]
  %v121 = vld [vmem:[%s1 + $0x118] sm:$0xf]
  %v122 = vld [vmem:[%s1 + $0x11c] sm:$0xf]
  %v123 = vld [vmem:[%s1 + $0x120] sm:$0xf]
  %v124 = vld [vmem:[%s1 + $0x124] sm:$0xf]
  %v125 = vld [vmem:[%s1 + $0x128] sm:$0xf]
  %v126 = vld [vmem:[%s1 + $0x12c] sm:$0xf]
  %v127 = vld [vmem:[%s1 + $0x130] sm:$0xf]
  %v128 = vld [vmem:[%s1 + $0x134] sm:$0xf]
  %v129 = vld [vmem:[%s1 + $0x138] sm:$0xf]
  %v130 = vld [vmem:[%s1 + $0x13c] sm:$0xf]
  %v131 = vld [vmem:[%s1 + $0x140] sm:$0xf]
  %v132 = vld [vmem:[%s1 + $0x144] sm:$0xf]
  %v133 = vld [vmem:[%s1 + $0x148] sm:$0xf]
  %v134 = vld [vmem:[%s1 + $0x14c] sm:$0xf]
  %v135 = vld [vmem:[%s1 + $0x150] sm:$0xf]
  %v136 = vld [vmem:[%s1 + $0x154] sm:$0xf]
  %v137 = vld [vmem:[%s1 + $0x158] sm:$0xf]
  %v138 = vld [vmem:[%s1 + $0x15c] sm:$0xf]
  %v139 = vld [vmem:[%s1 + $0x160] sm:$0xf]
  %v140 = vld [vmem:[%s1 + $0x164] sm:$0xf]
  %v141 = vld [vmem:[%s1 + $0x168] sm:$0xf]
  %v142 = vld [vmem:[%s1 + $0x16c] sm:$0xf]
  %v143 = vld [vmem:[%s1 + $0x170] sm:$0xf]
  %v144 = vld [vmem:[%s1 + $0x174] sm:$0xf]
  %v145 = vld [vmem:[%s1 + $0x178] sm:$0xf]
  %v146 = vld [vmem:[%s1 + $0x17c] sm:$0xf]
  %v147 = vld [vmem:[%s1 + $0x180] sm:$0xf]
  %v148 = vld [vmem:[%s1 + $0x184] sm:$0xf]
  %v149 = vld [vmem:[%s1 + $0x188] sm:$0xf]
  %v150 = vld [vmem:[%s1 + $0x18c] sm:$0xf]
  %v151 = vld [vmem:[%s1 + $0x190] sm:$0xf]
  %v152 = vld [vmem:[%s1 + $0x194] sm:$0xf]
  %v153 = vld [vmem:[%s1 + $0x198] sm:$0xf]
  %v154 = vld [vmem:[%s1 + $0x19c] sm:$0xf]
  %v155 = vld [vmem:[%s1 + $0x1a0] sm:$0xf]
  %v156 = vld [vmem:[%s1 + $0x1a4] sm:$0xf]
  %v157 = vld [vmem:[%s1 + $0x1a8] sm:$0xf]
  %v158 = vld [vmem:[%s1 + $0x1ac] sm:$0xf]
  %v159 = vld [vmem:[%s1 + $0x1b0] sm:$0xf]
  %v160 = vld [vmem:[%s1 + $0x1b4] sm:$0xf]
  %v161 = vld [vmem:[%s1 + $0x1b8] sm:$0xf]
  %v162 = vld [vmem:[%s1 + $0x1bc] sm:$0xf]
  %v163 = vld [vmem:[%s1 + $0x1c0] sm:$0xf]
  %v164 = vld [vmem:[%s1 + $0x1c4] sm:$0xf]
  %v165 = vld [vmem:[%s1 + $0x1c8] sm:$0xf]
  %v166 = vld [vmem:[%s1 + $0x1cc] sm:$0xf]
  %v167 = vld [vmem:[%s1 + $0x1d0] sm:$0xf]
  %v168 = vld [vmem:[%s1 + $0x1d4] sm:$0xf]
  %v169 = vld [vmem:[%s1 + $0x1d8] sm:$0xf]
  %v170 = vld [vmem:[%s1 + $0x1dc] sm:$0xf]
  %v171 = vld [vmem:[%s1 + $0x1e0] sm:$0xf]
  %v172 = vld [vmem:[%s1 + $0x1e4] sm:$0xf]
  %v173 = vld [vmem:[%s1 + $0x1e8] sm:$0xf]
  %v174 = vld [vmem:[%s1 + $0x1ec] sm:$0xf]
  %v175 = vld [vmem:[%s1 + $0x1f0] sm:$0xf]
  %v176 = vld [vmem:[%s1 + $0x1f4] sm:$0xf]
  %v177 = vld [vmem:[%s1 + $0x1f8] sm:$0xf]
  %v178 = vld [vmem:[%s1 + $0x1fc] sm:$0xf]
  %v179 = vld [vmem:[%s1 + $0x200] sm:$0xf]
  %v180 = vld [vmem:[%s1 + $0x204] sm:$0xf]
  %v181 = vld [vmem:[%s1 + $0x208] sm:$0xf]
  %v182 = vld [vmem:[%s1 + $0x20c] sm:$0xf]
  %v183 = vld [vmem:[%s1 + $0x210] sm:$0xf]
  %v184 = vld [vmem:[%s1 + $0x214] sm:$0xf]
  %v185 = vld [vmem:[%s1 + $0x218] sm:$0xf]
  %v186 = vld [vmem:[%s1 + $0x21c] sm:$0xf]
  %v187 = vld [vmem:[%s1 + $0x220] sm:$0xf]
  %v188 = vld [vmem:[%s1 + $0x224] sm:$0xf]
  %v189 = vld [vmem:[%s1 + $0x228] sm:$0xf]
  %v190 = vld [vmem:[%s1 + $0x22c] sm:$0x7]
  %v191 = vld [vmem:[%s2] sm:$0x1]
  %v193 = vlaneseq
  %v194 = vshrl.u32 %v193, 7
  %v195 = vsub.s32 0, %v194
  %v196 = vrot.slane %v191, %v195
  %v338 = vunpack.c.l.b16 %v51
  %v339 = vunpack.c.l.b16 %v52
  %v340 = vunpack.c.l.b16 %v53
  %v341 = vunpack.c.l.b16 %v54
  %v342 = vunpack.c.l.b16 %v55
  %v343 = vunpack.c.l.b16 %v56
  %v344 = vunpack.c.l.b16 %v57
  %v345 = vunpack.c.l.b16 %v58
  %v346 = vunpack.c.l.b16 %v59
  %v347 = vunpack.c.l.b16 %v60
  %v348 = vunpack.c.l.b16 %v61
  %v349 = vunpack.c.l.b16 %v62
  %v350 = vunpack.c.l.b16 %v63
  %v351 = vunpack.c.l.b16 %v64
  %v352 = vunpack.c.l.b16 %v65
  %v353 = vunpack.c.l.b16 %v66
  %v354 = vunpack.c.l.b16 %v67
  %v355 = vunpack.c.l.b16 %v68
  %v356 = vunpack.c.l.b16 %v69
  %v357 = vunpack.c.l.b16 %v70
  %v358 = vunpack.c.l.b16 %v71
  %v359 = vunpack.c.l.b16 %v72
  %v360 = vunpack.c.l.b16 %v73
  %v361 = vunpack.c.l.b16 %v74
  %v362 = vunpack.c.l.b16 %v75
  %v363 = vunpack.c.l.b16 %v76
  %v364 = vunpack.c.l.b16 %v77
  %v365 = vunpack.c.l.b16 %v78
  %v366 = vunpack.c.l.b16 %v79
  %v367 = vunpack.c.l.b16 %v80
  %v368 = vunpack.c.l.b16 %v81
  %v369 = vunpack.c.l.b16 %v82
  %v370 = vunpack.c.l.b16 %v83
  %v371 = vunpack.c.l.b16 %v84
  %v372 = vunpack.c.l.b16 %v85
  %v373 = vunpack.c.l.b16 %v86
  %v374 = vunpack.c.l.b16 %v87
  %v375 = vunpack.c.l.b16 %v88
  %v376 = vunpack.c.l.b16 %v89
  %v377 = vunpack.c.l.b16 %v90
  %v378 = vunpack.c.l.b16 %v91
  %v379 = vunpack.c.l.b16 %v92
  %v380 = vunpack.c.l.b16 %v93
  %v381 = vunpack.c.l.b16 %v94
  %v382 = vunpack.c.l.b16 %v95
  %v383 = vunpack.c.l.b16 %v96
  %v384 = vunpack.c.l.b16 %v97
  %v385 = vunpack.c.l.b16 %v98
  %v386 = vunpack.c.l.b16 %v99
  %v387 = vunpack.c.l.b16 %v100
  %v388 = vunpack.c.l.b16 %v101
  %v389 = vunpack.c.l.b16 %v102
  %v390 = vunpack.c.l.b16 %v103
  %v391 = vunpack.c.l.b16 %v104
  %v392 = vunpack.c.l.b16 %v105
  %v393 = vunpack.c.l.b16 %v106
  %v394 = vunpack.c.l.b16 %v107
  %v395 = vunpack.c.l.b16 %v108
  %v396 = vunpack.c.l.b16 %v109
  %v397 = vunpack.c.l.b16 %v110
  %v398 = vunpack.c.l.b16 %v111
  %v399 = vunpack.c.l.b16 %v112
  %v400 = vunpack.c.l.b16 %v113
  %v401 = vunpack.c.l.b16 %v114
  %v402 = vunpack.c.l.b16 %v115
  %v403 = vunpack.c.l.b16 %v116
  %v404 = vunpack.c.l.b16 %v117
  %v405 = vunpack.c.l.b16 %v118
  %v406 = vunpack.c.l.b16 %v119
  %v407 = vunpack.c.l.b16 %v120
  %v408 = vunpack.c.l.b16 %v121
  %v409 = vunpack.c.l.b16 %v122
  %v410 = vunpack.c.l.b16 %v123
  %v411 = vunpack.c.l.b16 %v124
  %v412 = vunpack.c.l.b16 %v125
  %v413 = vunpack.c.l.b16 %v126
  %v414 = vunpack.c.l.b16 %v127
  %v415 = vunpack.c.l.b16 %v128
  %v416 = vunpack.c.l.b16 %v129
  %v417 = vunpack.c.l.b16 %v130
  %v418 = vunpack.c.l.b16 %v131
  %v419 = vunpack.c.l.b16 %v132
  %v420 = vunpack.c.l.b16 %v133
  %v421 = vunpack.c.l.b16 %v134
  %v422 = vunpack.c.l.b16 %v135
  %v423 = vunpack.c.l.b16 %v136
  %v424 = vunpack.c.l.b16 %v137
  %v425 = vunpack.c.l.b16 %v138
  %v426 = vunpack.c.l.b16 %v139
  %v427 = vunpack.c.l.b16 %v140
  %v428 = vunpack.c.l.b16 %v141
  %v429 = vunpack.c.l.b16 %v142
  %v430 = vunpack.c.l.b16 %v143
  %v431 = vunpack.c.l.b16 %v144
  %v432 = vunpack.c.l.b16 %v145
  %v433 = vunpack.c.l.b16 %v146
  %v434 = vunpack.c.l.b16 %v147
  %v435 = vunpack.c.l.b16 %v148
  %v436 = vunpack.c.l.b16 %v149
  %v437 = vunpack.c.l.b16 %v150
  %v438 = vunpack.c.l.b16 %v151
  %v439 = vunpack.c.l.b16 %v152
  %v440 = vunpack.c.l.b16 %v153
  %v441 = vunpack.c.l.b16 %v154
  %v442 = vunpack.c.l.b16 %v155
  %v443 = vunpack.c.l.b16 %v156
  %v444 = vunpack.c.l.b16 %v157
  %v445 = vunpack.c.l.b16 %v158
  %v446 = vunpack.c.l.b16 %v159
  %v447 = vunpack.c.l.b16 %v160
  %v448 = vunpack.c.l.b16 %v161
  %v449 = vunpack.c.l.b16 %v162
  %v450 = vunpack.c.l.b16 %v163
  %v451 = vunpack.c.l.b16 %v164
  %v452 = vunpack.c.l.b16 %v165
  %v453 = vunpack.c.l.b16 %v166
  %v454 = vunpack.c.l.b16 %v167
  %v455 = vunpack.c.l.b16 %v168
  %v456 = vunpack.c.l.b16 %v169
  %v457 = vunpack.c.l.b16 %v170
  %v458 = vunpack.c.l.b16 %v171
  %v459 = vunpack.c.l.b16 %v172
  %v460 = vunpack.c.l.b16 %v173
  %v461 = vunpack.c.l.b16 %v174
  %v462 = vunpack.c.l.b16 %v175
  %v463 = vunpack.c.l.b16 %v176
  %v464 = vunpack.c.l.b16 %v177
  %v465 = vunpack.c.l.b16 %v178
  %v466 = vunpack.c.l.b16 %v179
  %v467 = vunpack.c.l.b16 %v180
  %v468 = vunpack.c.l.b16 %v181
  %v469 = vunpack.c.l.b16 %v182
  %v470 = vunpack.c.l.b16 %v183
  %v471 = vunpack.c.l.b16 %v184
  %v472 = vunpack.c.l.b16 %v185
  %v473 = vunpack.c.l.b16 %v186
  %v474 = vunpack.c.l.b16 %v187
  %v475 = vunpack.c.l.b16 %v188
  %v476 = vunpack.c.l.b16 %v189
  %v477 = vunpack.c.l.b16 %v190
  %v478 = vpack.c.b16 %v339, %v338
  %v479 = vpack.c.b16 %v341, %v340
  %v480 = vpack.c.b16 %v343, %v342
  %v481 = vpack.c.b16 %v345, %v344
  %v482 = vpack.c.b16 %v347, %v346
  %v483 = vpack.c.b16 %v349, %v348
  %v484 = vpack.c.b16 %v351, %v350
  %v485 = vpack.c.b16 %v353, %v352
  %v486 = vpack.c.b16 %v355, %v354
  %v487 = vpack.c.b16 %v357, %v356
  %v488 = vpack.c.b16 %v359, %v358
  %v489 = vpack.c.b16 %v361, %v360
  %v490 = vpack.c.b16 %v363, %v362
  %v491 = vpack.c.b16 %v365, %v364
  %v492 = vpack.c.b16 %v367, %v366
  %v493 = vpack.c.b16 %v369, %v368
  %v494 = vpack.c.b16 %v371, %v370
  %v495 = vpack.c.b16 %v373, %v372
  %v496 = vpack.c.b16 %v375, %v374
  %v497 = vpack.c.b16 %v377, %v376
  %v498 = vpack.c.b16 %v379, %v378
  %v499 = vpack.c.b16 %v381, %v380
  %v500 = vpack.c.b16 %v383, %v382
  %v501 = vpack.c.b16 %v385, %v384
  %v502 = vpack.c.b16 %v387, %v386
  %v503 = vpack.c.b16 %v389, %v388
  %v504 = vpack.c.b16 %v391, %v390
  %v505 = vpack.c.b16 %v393, %v392
  %v506 = vpack.c.b16 %v395, %v394
  %v507 = vpack.c.b16 %v397, %v396
  %v508 = vpack.c.b16 %v399, %v398
  %v509 = vpack.c.b16 %v401, %v400
  %v510 = vpack.c.b16 %v403, %v402
  %v511 = vpack.c.b16 %v405, %v404
  %v512 = vpack.c.b16 %v407, %v406
  %v513 = vpack.c.b16 %v409, %v408
  %v514 = vpack.c.b16 %v411, %v410
  %v515 = vpack.c.b16 %v413, %v412
  %v516 = vpack.c.b16 %v415, %v414
  %v517 = vpack.c.b16 %v417, %v416
  %v518 = vpack.c.b16 %v419, %v418
  %v519 = vpack.c.b16 %v421, %v420
  %v520 = vpack.c.b16 %v423, %v422
  %v521 = vpack.c.b16 %v425, %v424
  %v522 = vpack.c.b16 %v427, %v426
  %v523 = vpack.c.b16 %v429, %v428
  %v524 = vpack.c.b16 %v431, %v430
  %v525 = vpack.c.b16 %v433, %v432
  %v526 = vpack.c.b16 %v435, %v434
  %v527 = vpack.c.b16 %v437, %v436
  %v528 = vpack.c.b16 %v439, %v438
  %v529 = vpack.c.b16 %v441, %v440
  %v530 = vpack.c.b16 %v443, %v442
  %v531 = vpack.c.b16 %v445, %v444
  %v532 = vpack.c.b16 %v447, %v446
  %v533 = vpack.c.b16 %v449, %v448
  %v534 = vpack.c.b16 %v451, %v450
  %v535 = vpack.c.b16 %v453, %v452
  %v536 = vpack.c.b16 %v455, %v454
  %v537 = vpack.c.b16 %v457, %v456
  %v538 = vpack.c.b16 %v459, %v458
  %v539 = vpack.c.b16 %v461, %v460
  %v540 = vpack.c.b16 %v463, %v462
  %v541 = vpack.c.b16 %v465, %v464
  %v542 = vpack.c.b16 %v467, %v466
  %v543 = vpack.c.b16 %v469, %v468
  %v544 = vpack.c.b16 %v471, %v470
  %v545 = vpack.c.b16 %v473, %v472
  %v546 = vpack.c.b16 %v475, %v474
  %v547 = vpack.c.b16 %v477, %v476
  %vm617 = vcmask 769024
  %v619 = vsel %vm617, %v50, 0
  %vm621 = vcmask 1046528
  %v623 = vsel %vm621, %v547, 0
  %625 = vmatprep.subr.bf16.mxu0 0
  %626 = vmatpush1.bf16.msra.mxu0 %v485
  %627 = vmatprep.subr.bf16.mxu0 0
  %628 = vmatpush1.bf16.msra.mxu0 %v484
  %629 = vmatprep.subr.bf16.mxu0 0
  %630 = vmatpush1.bf16.msra.mxu0 %v483
  %631 = vmatprep.subr.bf16.mxu0 0
  %632 = vmatpush1.bf16.msra.mxu0 %v482
  %633 = vmatprep.subr.bf16.mxu0 0
  %634 = vmatpush1.bf16.msra.mxu0 %v481
  %635 = vmatprep.subr.bf16.mxu0 0
  %636 = vmatpush1.bf16.msra.mxu0 %v480
  %637 = vmatprep.subr.bf16.mxu0 0
  %638 = vmatpush1.bf16.msra.mxu0 %v479
  %639 = vmatprep.subr.bf16.mxu0 0
  %640 = vmatpush1.bf16.msra.mxu0 %v478
  %641 = vmatprep.subr.bf16.mxu0 0
  %642 = vmatpush2.bf16.msra.mxu0 %v493
  %643 = vmatprep.subr.bf16.mxu0 0
  %644 = vmatpush2.bf16.msra.mxu0 %v492
  %645 = vmatprep.subr.bf16.mxu0 0
  %646 = vmatpush2.bf16.msra.mxu0 %v491
  %647 = vmatprep.subr.bf16.mxu0 0
  %648 = vmatpush2.bf16.msra.mxu0 %v490
  %649 = vmatprep.subr.bf16.mxu0 0
  %650 = vmatpush2.bf16.msra.mxu0 %v489
  %651 = vmatprep.subr.bf16.mxu0 0
  %652 = vmatpush2.bf16.msra.mxu0 %v488
  %653 = vmatprep.subr.bf16.mxu0 0
  %654 = vmatpush2.bf16.msra.mxu0 %v487
  %655 = vmatprep.subr.bf16.mxu0 0
  %656 = vmatpush2.bf16.msra.mxu0 %v486
  %657 = vmatprep.mubr.bf16.mxu0 %v43
  %658 = vmatmul.mubr.bf16.gmra.mxu0 %v42
  %v659 = vpop.f32.mrf.mxu0
  %v660 = vadd.f32 %v196, %v659
  %v661 = vpop.f32.mrf.mxu0
  %v662 = vpop.f32.mrf.mxu0
  %v663 = vpop.f32.mrf.mxu0
  %664 = vdwg.mxu0
  %665 = vmatprep.subr.bf16.mxu0 0
  %666 = vmatpush1.bf16.msra.mxu0 %v501
  %667 = vmatprep.subr.bf16.mxu0 0
  %668 = vmatpush1.bf16.msra.mxu0 %v500
  %669 = vmatprep.subr.bf16.mxu0 0
  %670 = vmatpush1.bf16.msra.mxu0 %v499
  %671 = vmatprep.subr.bf16.mxu0 0
  %672 = vmatpush1.bf16.msra.mxu0 %v498
  %673 = vmatprep.subr.bf16.mxu0 0
  %674 = vmatpush1.bf16.msra.mxu0 %v497
  %675 = vmatprep.subr.bf16.mxu0 0
  %676 = vmatpush1.bf16.msra.mxu0 %v496
  %677 = vmatprep.subr.bf16.mxu0 0
  %678 = vmatpush1.bf16.msra.mxu0 %v495
  %679 = vmatprep.subr.bf16.mxu0 0
  %680 = vmatpush1.bf16.msra.mxu0 %v494
  %681 = vmatprep.subr.bf16.mxu0 0
  %682 = vmatpush2.bf16.msra.mxu0 %v509
  %683 = vmatprep.subr.bf16.mxu0 0
  %684 = vmatpush2.bf16.msra.mxu0 %v508
  %685 = vmatprep.subr.bf16.mxu0 0
  %686 = vmatpush2.bf16.msra.mxu0 %v507
  %687 = vmatprep.subr.bf16.mxu0 0
  %688 = vmatpush2.bf16.msra.mxu0 %v506
  %689 = vmatprep.subr.bf16.mxu0 0
  %690 = vmatpush2.bf16.msra.mxu0 %v505
  %691 = vmatprep.subr.bf16.mxu0 0
  %692 = vmatpush2.bf16.msra.mxu0 %v504
  %693 = vmatprep.subr.bf16.mxu0 0
  %694 = vmatpush2.bf16.msra.mxu0 %v503
  %695 = vmatprep.subr.bf16.mxu0 0
  %696 = vmatpush2.bf16.msra.mxu0 %v502
  %697 = vmatprep.mubr.bf16.mxu0 %v45
  %698 = vmatmul.mubr.bf16.gmra.mxu0 %v44
  %v699 = vpop.f32.mrf.mxu0
  %v700 = vadd.f32 %v660, %v699
  %v701 = vpop.f32.mrf.mxu0
  %v702 = vpop.f32.mrf.mxu0
  %v703 = vpop.f32.mrf.mxu0
  %704 = vdwg.mxu0
  %705 = vmatprep.subr.bf16.mxu0 0
  %706 = vmatpush1.bf16.msra.mxu0 %v517
  %707 = vmatprep.subr.bf16.mxu0 0
  %708 = vmatpush1.bf16.msra.mxu0 %v516
  %709 = vmatprep.subr.bf16.mxu0 0
  %710 = vmatpush1.bf16.msra.mxu0 %v515
  %711 = vmatprep.subr.bf16.mxu0 0
  %712 = vmatpush1.bf16.msra.mxu0 %v514
  %713 = vmatprep.subr.bf16.mxu0 0
  %714 = vmatpush1.bf16.msra.mxu0 %v513
  %715 = vmatprep.subr.bf16.mxu0 0
  %716 = vmatpush1.bf16.msra.mxu0 %v512
  %717 = vmatprep.subr.bf16.mxu0 0
  %718 = vmatpush1.bf16.msra.mxu0 %v511
  %719 = vmatprep.subr.bf16.mxu0 0
  %720 = vmatpush1.bf16.msra.mxu0 %v510
  %721 = vmatprep.subr.bf16.mxu0 0
  %722 = vmatpush2.bf16.msra.mxu0 %v525
  %723 = vmatprep.subr.bf16.mxu0 0
  %724 = vmatpush2.bf16.msra.mxu0 %v524
  %725 = vmatprep.subr.bf16.mxu0 0
  %726 = vmatpush2.bf16.msra.mxu0 %v523
  %727 = vmatprep.subr.bf16.mxu0 0
  %728 = vmatpush2.bf16.msra.mxu0 %v522
  %729 = vmatprep.subr.bf16.mxu0 0
  %730 = vmatpush2.bf16.msra.mxu0 %v521
  %731 = vmatprep.subr.bf16.mxu0 0
  %732 = vmatpush2.bf16.msra.mxu0 %v520
  %733 = vmatprep.subr.bf16.mxu0 0
  %734 = vmatpush2.bf16.msra.mxu0 %v519
  %735 = vmatprep.subr.bf16.mxu0 0
  %736 = vmatpush2.bf16.msra.mxu0 %v518
  %737 = vmatprep.mubr.bf16.mxu0 %v47
  %738 = vmatmul.mubr.bf16.gmra.mxu0 %v46
  %v739 = vpop.f32.mrf.mxu0
  %v740 = vadd.f32 %v700, %v739
  %v741 = vpop.f32.mrf.mxu0
  %v742 = vpop.f32.mrf.mxu0
  %v743 = vpop.f32.mrf.mxu0
  %744 = vdwg.mxu0
  %745 = vmatprep.subr.bf16.mxu0 0
  %746 = vmatpush1.bf16.msra.mxu0 %v533
  %747 = vmatprep.subr.bf16.mxu0 0
  %748 = vmatpush1.bf16.msra.mxu0 %v532
  %749 = vmatprep.subr.bf16.mxu0 0
  %750 = vmatpush1.bf16.msra.mxu0 %v531
  %751 = vmatprep.subr.bf16.mxu0 0
  %752 = vmatpush1.bf16.msra.mxu0 %v530
  %753 = vmatprep.subr.bf16.mxu0 0
  %754 = vmatpush1.bf16.msra.mxu0 %v529
  %755 = vmatprep.subr.bf16.mxu0 0
  %756 = vmatpush1.bf16.msra.mxu0 %v528
  %757 = vmatprep.subr.bf16.mxu0 0
  %758 = vmatpush1.bf16.msra.mxu0 %v527
  %759 = vmatprep.subr.bf16.mxu0 0
  %760 = vmatpush1.bf16.msra.mxu0 %v526
  %761 = vmatprep.subr.bf16.mxu0 0
  %762 = vmatpush2.bf16.msra.mxu0 %v541
  %763 = vmatprep.subr.bf16.mxu0 0
  %764 = vmatpush2.bf16.msra.mxu0 %v540
  %765 = vmatprep.subr.bf16.mxu0 0
  %766 = vmatpush2.bf16.msra.mxu0 %v539
  %767 = vmatprep.subr.bf16.mxu0 0
  %768 = vmatpush2.bf16.msra.mxu0 %v538
  %769 = vmatprep.subr.bf16.mxu0 0
  %770 = vmatpush2.bf16.msra.mxu0 %v537
  %771 = vmatprep.subr.bf16.mxu0 0
  %772 = vmatpush2.bf16.msra.mxu0 %v536
  %773 = vmatprep.subr.bf16.mxu0 0
  %774 = vmatpush2.bf16.msra.mxu0 %v535
  %775 = vmatprep.subr.bf16.mxu0 0
  %776 = vmatpush2.bf16.msra.mxu0 %v534
  %777 = vmatprep.mubr.bf16.mxu0 %v49
  %778 = vmatmul.mubr.bf16.gmra.mxu0 %v48
  %v779 = vpop.f32.mrf.mxu0
  %v780 = vadd.f32 %v740, %v779
  %v781 = vpop.f32.mrf.mxu0
  %v782 = vpop.f32.mrf.mxu0
  %v783 = vpop.f32.mrf.mxu0
  %784 = vdwg.mxu0
  %785 = vmatprep.subr.bf16.mxu0 0
  %786 = vmatpush1.bf16.msra.mxu0 0
  %787 = vmatprep.subr.bf16.mxu0 0
  %788 = vmatpush1.bf16.msra.mxu0 0
  %789 = vmatprep.subr.bf16.mxu0 0
  %790 = vmatpush1.bf16.msra.mxu0 %v623
  %791 = vmatprep.subr.bf16.mxu0 0
  %792 = vmatpush1.bf16.msra.mxu0 %v546
  %793 = vmatprep.subr.bf16.mxu0 0
  %794 = vmatpush1.bf16.msra.mxu0 %v545
  %795 = vmatprep.subr.bf16.mxu0 0
  %796 = vmatpush1.bf16.msra.mxu0 %v544
  %797 = vmatprep.subr.bf16.mxu0 0
  %798 = vmatpush1.bf16.msra.mxu0 %v543
  %799 = vmatprep.subr.bf16.mxu0 0
  %800 = vmatpush1.bf16.msra.mxu0 %v542
  %801 = vmatprep.subr.bf16.mxu0 0
  %802 = vmatpush2.bf16.msra.mxu0 0
  %803 = vmatprep.subr.bf16.mxu0 0
  %804 = vmatpush2.bf16.msra.mxu0 0
  %805 = vmatprep.subr.bf16.mxu0 0
  %806 = vmatpush2.bf16.msra.mxu0 0
  %807 = vmatprep.subr.bf16.mxu0 0
  %808 = vmatpush2.bf16.msra.mxu0 0
  %809 = vmatprep.subr.bf16.mxu0 0
  %810 = vmatpush2.bf16.msra.mxu0 0
  %811 = vmatprep.subr.bf16.mxu0 0
  %812 = vmatpush2.bf16.msra.mxu0 0
  %813 = vmatprep.subr.bf16.mxu0 0
  %814 = vmatpush2.bf16.msra.mxu0 0
  %815 = vmatprep.subr.bf16.mxu0 0
  %816 = vmatpush2.bf16.msra.mxu0 0
  %817 = vmatprep.mubr.bf16.mxu0 0
  %818 = vmatmul.mubr.bf16.gmra.mxu0 %v619
  %v819 = vpop.f32.mrf.mxu0
  %v820 = vadd.f32 %v780, %v819
  %v821 = vpop.f32.mrf.mxu0
  %v822 = vpop.f32.mrf.mxu0
  %v823 = vpop.f32.mrf.mxu0
  %824 = vdwg.mxu0
  %v825 = vmax.f32 %v820, 0.0
  %v826 = vld [vmem:[%s3] sm:$0xff]
  %v827 = vld [vmem:[%s3 + $0x8] sm:$0x3]
  %v828 = vld [vmem:[%s4] sm:$0x1]
  %v830 = vlaneseq
  %v831 = vshrl.u32 %v830, 7
  %v832 = vsub.s32 0, %v831
  %v833 = vrot.slane %v828, %v832
  %vm835 = vcmask 80896
  %v837 = vsel %vm835, %v825, 0
  %vm839 = vcmask 1041408
  %v841 = vsel %vm839, %v827, 0
  %843 = vmatprep.subr.mxu0 0.0
  %844 = vmatpush1.msra.mxu0 0.0
  %845 = vmatprep.subr.mxu0 0.0
  %846 = vmatpush1.msra.mxu0 0.0
  %847 = vmatprep.subr.mxu0 0.0
  %848 = vmatpush1.msra.mxu0 0.0
  %849 = vmatprep.subr.mxu0 0.0
  %850 = vmatpush1.msra.mxu0 0.0
  %851 = vmatprep.subr.mxu0 0.0
  %852 = vmatpush1.msra.mxu0 0.0
  %853 = vmatprep.subr.mxu0 0.0
  %854 = vmatpush1.msra.mxu0 0.0
  %855 = vmatprep.subr.mxu0 0.0
  %856 = vmatpush1.msra.mxu0 0.0
  %857 = vmatprep.subr.mxu0 0.0
  %858 = vmatpush1.msra.mxu0 0.0
  %859 = vmatprep.subr.mxu0 0.0
  %860 = vmatpush1.msra.mxu0 0.0
  %861 = vmatprep.subr.mxu0 0.0
  %862 = vmatpush1.msra.mxu0 0.0
  %863 = vmatprep.subr.mxu0 0.0
  %864 = vmatpush1.msra.mxu0 0.0
  %865 = vmatprep.subr.mxu0 0.0
  %866 = vmatpush1.msra.mxu0 0.0
  %867 = vmatprep.subr.mxu0 0.0
  %868 = vmatpush1.msra.mxu0 0.0
  %869 = vmatprep.subr.mxu0 0.0
  %870 = vmatpush1.msra.mxu0 0.0
  %871 = vmatprep.subr.mxu0 0.0
  %872 = vmatpush1.msra.mxu0 %v841
  %873 = vmatprep.subr.mxu0 0.0
  %874 = vmatpush1.msra.mxu0 %v826
  %875 = vmatprep.subr.mxu0 0.0
  %876 = vmatpush2.msra.mxu0 0.0
  %877 = vmatprep.subr.mxu0 0.0
  %878 = vmatpush2.msra.mxu0 0.0
  %879 = vmatprep.subr.mxu0 0.0
  %880 = vmatpush2.msra.mxu0 0.0
  %881 = vmatprep.subr.mxu0 0.0
  %882 = vmatpush2.msra.mxu0 0.0
  %883 = vmatprep.subr.mxu0 0.0
  %884 = vmatpush2.msra.mxu0 0.0
  %885 = vmatprep.subr.mxu0 0.0
  %886 = vmatpush2.msra.mxu0 0.0
  %887 = vmatprep.subr.mxu0 0.0
  %888 = vmatpush2.msra.mxu0 0.0
  %889 = vmatprep.subr.mxu0 0.0
  %890 = vmatpush2.msra.mxu0 0.0
  %891 = vmatprep.subr.mxu0 0.0
  %892 = vmatpush2.msra.mxu0 0.0
  %893 = vmatprep.subr.mxu0 0.0
  %894 = vmatpush2.msra.mxu0 0.0
  %895 = vmatprep.subr.mxu0 0.0
  %896 = vmatpush2.msra.mxu0 0.0
  %897 = vmatprep.subr.mxu0 0.0
  %898 = vmatpush2.msra.mxu0 0.0
  %899 = vmatprep.subr.mxu0 0.0
  %900 = vmatpush2.msra.mxu0 0.0
  %901 = vmatprep.subr.mxu0 0.0
  %902 = vmatpush2.msra.mxu0 0.0
  %903 = vmatprep.subr.mxu0 0.0
  %904 = vmatpush2.msra.mxu0 0.0
  %905 = vmatprep.subr.mxu0 0.0
  %906 = vmatpush2.msra.mxu0 0.0
  %907 = vmatprep.mubr.f32.mxu0 0.0
  %908 = vmatmul.mubr.f32.gmra.mxu0 %v837
  %v909 = vpop.f32.mrf.mxu0
  %v910 = vadd.f32 %v833, %v909
  %v911 = vpop.f32.mrf.mxu0
  %912 = vdwg.mxu0
  %v913 = vmax.f32 %v910, 0.0
  %v914 = vld [vmem:[%s5] sm:$0xff]
  %v915 = vld [vmem:[%s5 + $0x8] sm:$0xf]
  %v916 = vld [vmem:[%s6] sm:$0x1]
  %v918 = vlaneseq
  %v919 = vshrl.u32 %v918, 7
  %v920 = vsub.s32 0, %v919
  %v921 = vrot.slane %v916, %v920
  %vm923 = vcmask 97280
  %v925 = vsel %vm923, %v913, 0
  %vm927 = vcmask 1043456
  %v929 = vsel %vm927, %v915, 0
  %931 = vmatprep.subr.mxu0 0.0
  %932 = vmatpush1.msra.mxu0 0.0
  %933 = vmatprep.subr.mxu0 0.0
  %934 = vmatpush1.msra.mxu0 0.0
  %935 = vmatprep.subr.mxu0 0.0
  %936 = vmatpush1.msra.mxu0 0.0
  %937 = vmatprep.subr.mxu0 0.0
  %938 = vmatpush1.msra.mxu0 0.0
  %939 = vmatprep.subr.mxu0 0.0
  %940 = vmatpush1.msra.mxu0 0.0
  %941 = vmatprep.subr.mxu0 0.0
  %942 = vmatpush1.msra.mxu0 0.0
  %943 = vmatprep.subr.mxu0 0.0
  %944 = vmatpush1.msra.mxu0 0.0
  %945 = vmatprep.subr.mxu0 0.0
  %946 = vmatpush1.msra.mxu0 0.0
  %947 = vmatprep.subr.mxu0 0.0
  %948 = vmatpush1.msra.mxu0 0.0
  %949 = vmatprep.subr.mxu0 0.0
  %950 = vmatpush1.msra.mxu0 0.0
  %951 = vmatprep.subr.mxu0 0.0
  %952 = vmatpush1.msra.mxu0 0.0
  %953 = vmatprep.subr.mxu0 0.0
  %954 = vmatpush1.msra.mxu0 0.0
  %955 = vmatprep.subr.mxu0 0.0
  %956 = vmatpush1.msra.mxu0 0.0
  %957 = vmatprep.subr.mxu0 0.0
  %958 = vmatpush1.msra.mxu0 0.0
  %959 = vmatprep.subr.mxu0 0.0
  %960 = vmatpush1.msra.mxu0 %v929
  %961 = vmatprep.subr.mxu0 0.0
  %962 = vmatpush1.msra.mxu0 %v914
  %963 = vmatprep.subr.mxu0 0.0
  %964 = vmatpush2.msra.mxu0 0.0
  %965 = vmatprep.subr.mxu0 0.0
  %966 = vmatpush2.msra.mxu0 0.0
  %967 = vmatprep.subr.mxu0 0.0
  %968 = vmatpush2.msra.mxu0 0.0
  %969 = vmatprep.subr.mxu0 0.0
  %970 = vmatpush2.msra.mxu0 0.0
  %971 = vmatprep.subr.mxu0 0.0
  %972 = vmatpush2.msra.mxu0 0.0
  %973 = vmatprep.subr.mxu0 0.0
  %974 = vmatpush2.msra.mxu0 0.0
  %975 = vmatprep.subr.mxu0 0.0
  %976 = vmatpush2.msra.mxu0 0.0
  %977 = vmatprep.subr.mxu0 0.0
  %978 = vmatpush2.msra.mxu0 0.0
  %979 = vmatprep.subr.mxu0 0.0
  %980 = vmatpush2.msra.mxu0 0.0
  %981 = vmatprep.subr.mxu0 0.0
  %982 = vmatpush2.msra.mxu0 0.0
  %983 = vmatprep.subr.mxu0 0.0
  %984 = vmatpush2.msra.mxu0 0.0
  %985 = vmatprep.subr.mxu0 0.0
  %986 = vmatpush2.msra.mxu0 0.0
  %987 = vmatprep.subr.mxu0 0.0
  %988 = vmatpush2.msra.mxu0 0.0
  %989 = vmatprep.subr.mxu0 0.0
  %990 = vmatpush2.msra.mxu0 0.0
  %991 = vmatprep.subr.mxu0 0.0
  %992 = vmatpush2.msra.mxu0 0.0
  %993 = vmatprep.subr.mxu0 0.0
  %994 = vmatpush2.msra.mxu0 0.0
  %995 = vmatprep.mubr.f32.mxu0 0.0
  %996 = vmatmul.mubr.f32.gmra.mxu0 %v925
  %v997 = vpop.f32.mrf.mxu0
  %v998 = vadd.f32 %v921, %v997
  %v999 = vpop.f32.mrf.mxu0
  %1000 = vdwg.mxu0
  %v1001 = vmax.f32 %v998, 0.0
  %v1002 = vld [vmem:[%s7] sm:$0xff]
  %v1003 = vld [vmem:[%s7 + $0x8] sm:$0xff]
  %v1004 = vld [vmem:[%s8] sm:$0x1]
  %v1006 = vlaneseq
  %v1007 = vshrl.u32 %v1006, 7
  %v1008 = vsub.s32 0, %v1007
  %v1009 = vrot.slane %v1004, %v1008
  %vm1011 = vcmask 130048
  %v1013 = vsel %vm1011, %v1001, 0
  %1015 = vmatprep.subr.mxu0 0.0
  %1016 = vmatpush1.msra.mxu0 0.0
  %1017 = vmatprep.subr.mxu0 0.0
  %1018 = vmatpush1.msra.mxu0 0.0
  %1019 = vmatprep.subr.mxu0 0.0
  %1020 = vmatpush1.msra.mxu0 0.0
  %1021 = vmatprep.subr.mxu0 0.0
  %1022 = vmatpush1.msra.mxu0 0.0
  %1023 = vmatprep.subr.mxu0 0.0
  %1024 = vmatpush1.msra.mxu0 0.0
  %1025 = vmatprep.subr.mxu0 0.0
  %1026 = vmatpush1.msra.mxu0 0.0
  %1027 = vmatprep.subr.mxu0 0.0
  %1028 = vmatpush1.msra.mxu0 0.0
  %1029 = vmatprep.subr.mxu0 0.0
  %1030 = vmatpush1.msra.mxu0 0.0
  %1031 = vmatprep.subr.mxu0 0.0
  %1032 = vmatpush1.msra.mxu0 0.0
  %1033 = vmatprep.subr.mxu0 0.0
  %1034 = vmatpush1.msra.mxu0 0.0
  %1035 = vmatprep.subr.mxu0 0.0
  %1036 = vmatpush1.msra.mxu0 0.0
  %1037 = vmatprep.subr.mxu0 0.0
  %1038 = vmatpush1.msra.mxu0 0.0
  %1039 = vmatprep.subr.mxu0 0.0
  %1040 = vmatpush1.msra.mxu0 0.0
  %1041 = vmatprep.subr.mxu0 0.0
  %1042 = vmatpush1.msra.mxu0 0.0
  %1043 = vmatprep.subr.mxu0 0.0
  %1044 = vmatpush1.msra.mxu0 %v1003
  %1045 = vmatprep.subr.mxu0 0.0
  %1046 = vmatpush1.msra.mxu0 %v1002
  %1047 = vmatprep.subr.mxu0 0.0
  %1048 = vmatpush2.msra.mxu0 0.0
  %1049 = vmatprep.subr.mxu0 0.0
  %1050 = vmatpush2.msra.mxu0 0.0
  %1051 = vmatprep.subr.mxu0 0.0
  %1052 = vmatpush2.msra.mxu0 0.0
  %1053 = vmatprep.subr.mxu0 0.0
  %1054 = vmatpush2.msra.mxu0 0.0
  %1055 = vmatprep.subr.mxu0 0.0
  %1056 = vmatpush2.msra.mxu0 0.0
  %1057 = vmatprep.subr.mxu0 0.0
  %1058 = vmatpush2.msra.mxu0 0.0
  %1059 = vmatprep.subr.mxu0 0.0
  %1060 = vmatpush2.msra.mxu0 0.0
  %1061 = vmatprep.subr.mxu0 0.0
  %1062 = vmatpush2.msra.mxu0 0.0
  %1063 = vmatprep.subr.mxu0 0.0
  %1064 = vmatpush2.msra.mxu0 0.0
  %1065 = vmatprep.subr.mxu0 0.0
  %1066 = vmatpush2.msra.mxu0 0.0
  %1067 = vmatprep.subr.mxu0 0.0
  %1068 = vmatpush2.msra.mxu0 0.0
  %1069 = vmatprep.subr.mxu0 0.0
  %1070 = vmatpush2.msra.mxu0 0.0
  %1071 = vmatprep.subr.mxu0 0.0
  %1072 = vmatpush2.msra.mxu0 0.0
  %1073 = vmatprep.subr.mxu0 0.0
  %1074 = vmatpush2.msra.mxu0 0.0
  %1075 = vmatprep.subr.mxu0 0.0
  %1076 = vmatpush2.msra.mxu0 0.0
  %1077 = vmatprep.subr.mxu0 0.0
  %1078 = vmatpush2.msra.mxu0 0.0
  %1079 = vmatprep.mubr.f32.mxu0 0.0
  %1080 = vmatmul.mubr.f32.gmra.mxu0 %v1013
  %v1081 = vpop.f32.mrf.mxu0
  %v1082 = vadd.f32 %v1009, %v1081
  %v1083 = vpop.f32.mrf.mxu0
  %1084 = vdwg.mxu0
  %vm1085 = vcmask 15360
  %1086 = vst.msk [vmem:[%s9] sm:$0xff] %vm1085, %v1082
  // Predicated region
  $region38: #{tpu_custom_call.1} parent=0 // pred_check
    _
  $region39: #{tpu_custom_call.1} parent=0 // pred_check_branch
    %1088 = sbr.rel (0) target = $region41
  $region40: #{tpu_custom_call.1} parent=0 // pred_region
    _
  $region41: #{tpu_custom_call.1} parent=0 // pred_fallthru
    _
  // Predicated region
  $region42: #{tpu_custom_call.1} parent=0 // pred_check
    _
  $region43: #{tpu_custom_call.1} parent=0 // pred_check_branch
    %1090 = sbr.rel (0) target = $region45
  $region44: #{tpu_custom_call.1} parent=0 // pred_region
    _
  $region45: #{tpu_custom_call.1} parent=0 // pred_fallthru
    _

</llo_original>
